<compile_context>
chip_gen: v7x
topology: tpu7x:2x2x1
jax: 0.10.0
libtpu: 0.0.40
codegen_flags: <defaults>
</compile_context>

<pallas_src>
import jax
import jax.numpy as jnp
from jax.experimental import pallas as pl
from jax.experimental.pallas import tpu as pltpu


def _link_predictor_kernel(xi_ref, xj_ref, w1i_ref, w1j_ref, b1_ref, w2_ref,
                           b2_ref, o_ref):
    """Fused LinkPredictor forward for one row-tile of edge pairs."""
    # lin1(cat([x_i, x_j])) == x_i @ W1[:C] + x_j @ W1[C:]   (MXU, f32 accum)
    h = jnp.dot(xi_ref[...], w1i_ref[...], preferred_element_type=jnp.float32)
    h = h + jnp.dot(xj_ref[...], w1j_ref[...],
                    preferred_element_type=jnp.float32)
    h = jnp.maximum(h + b1_ref[...], 0.0)        # bias + ReLU on f32 accumulator
    # TODO(synk): training-mode dropout (p=0.3 masking/scaling) not implemented;
    # eval/inference semantics are used (identity).
    # lin2 (H -> 1) on the VPU: multiply by the (1, H) W2 row and reduce over
    # lanes -- avoids an N=1 MXU matmul that would waste the result FIFO.
    logits = jnp.sum(h * w2_ref[...], axis=-1, keepdims=True)      # (tm, 1)
    # Store lane-dense: relayout the (tm, 1) column into a (1, tm) lane row.
    row = jnp.transpose(logits) + b2_ref[0]                        # (1, tm)
    o_ref[...] = row.astype(o_ref.dtype)


def _round_up(v, m):
    return ((v + m - 1) // m) * m


def link_predictor_forward(x_i, x_j, params, *, tm=1024, compute_dtype=None):
    """x_i, x_j: (B, C) node embeddings for the two endpoints of each edge.

    Returns logits of shape (B,).  `compute_dtype=jnp.bfloat16` casts the
    matmul inputs (x and W1) at the call boundary; accumulation stays f32.
    """
    b, c = x_i.shape
    w1 = params["w1"]                       # (2*C, H)
    b1 = params["b1"]                       # (1, H)
    w2 = params["w2"]                       # (H, 1)
    b2 = params["b2"]                       # (1, 1)
    h_dim = w1.shape[1]

    w1i, w1j = w1[:c], w1[c:]               # split the concat once, wrapper-side
    w2_row = w2.reshape(1, h_dim).astype(jnp.float32)
    b1 = b1.reshape(1, h_dim).astype(jnp.float32)
    b2_s = b2.reshape(1).astype(jnp.float32)  # scalar -> SMEM

    if compute_dtype is not None:
        x_i = x_i.astype(compute_dtype)
        x_j = x_j.astype(compute_dtype)
        w1i = w1i.astype(compute_dtype)
        w1j = w1j.astype(compute_dtype)

    # --- row-tile selection -------------------------------------------------
    # Big batches: large 128-aligned tiles (kernel is HBM/overhead bound).
    # Mid-size batches: split into >=2 tiles so both v7x TensorCores get work.
    # Tiny batches: one minimal 8-aligned tile.
    if b > tm:
        tm_eff = _round_up(tm, 128)
    elif b >= 256:
        tm_eff = _round_up(pl.cdiv(b, 2), 128)
    else:
        tm_eff = _round_up(max(b, 1), 8)
    tm = max(8, tm_eff)
    n_tiles = pl.cdiv(b, tm)
    b_pad = n_tiles * tm
    if b_pad != b:
        pad = ((0, b_pad - b), (0, 0))
        x_i = jnp.pad(x_i, pad)
        x_j = jnp.pad(x_j, pad)

    out = pl.pallas_call(
        _link_predictor_kernel,
        out_shape=jax.ShapeDtypeStruct((1, b_pad), jnp.float32),
        grid=(n_tiles,),
        in_specs=[
            pl.BlockSpec((tm, c), lambda i: (i, 0)),        # x_i tile
            pl.BlockSpec((tm, c), lambda i: (i, 0)),        # x_j tile
            pl.BlockSpec((c, h_dim), lambda i: (0, 0)),     # W1[:C]
            pl.BlockSpec((c, h_dim), lambda i: (0, 0)),     # W1[C:]
            pl.BlockSpec((1, h_dim), lambda i: (0, 0)),     # b1 row
            pl.BlockSpec((1, h_dim), lambda i: (0, 0)),     # W2 row
            pl.BlockSpec(memory_space=pltpu.MemorySpace.SMEM),  # b2 scalar
        ],
        out_specs=pl.BlockSpec((1, tm), lambda i: (0, i)),  # lane-dense row
        compiler_params=pltpu.CompilerParams(
            dimension_semantics=("parallel",)),
    )(x_i, x_j, w1i, w1j, b1, w2_row, b2_s)

    return out[0, :b]   # squeeze(-1) + drop row padding


def init_params(key, in_channels):
    """Mimics torch.nn.Linear default init (shapes are what matter)."""
    hidden = max(32, in_channels // 2)
    k1, k2, k3, k4 = jax.random.split(key, 4)
    fan1 = in_channels * 2
    bound1 = 1.0 / jnp.sqrt(fan1)
    bound2 = 1.0 / jnp.sqrt(hidden)
    return {
        "w1": jax.random.uniform(k1, (fan1, hidden), jnp.float32, -bound1, bound1),
        "b1": jax.random.uniform(k2, (1, hidden), jnp.float32, -bound1, bound1),
        "w2": jax.random.uniform(k3, (hidden, 1), jnp.float32, -bound2, bound2),
        "b2": jax.random.uniform(k4, (1, 1), jnp.float32, -bound2, bound2),
    }


def link_predictor_reference(x_i, x_j, params):
    """Pure-JAX reference for correctness validation."""
    x = jnp.concatenate([x_i, x_j], axis=-1)
    h = jnp.maximum(x @ params["w1"] + params["b1"], 0.0)
    return (h @ params["w2"] + params["b2"])[:, 0]


if __name__ == "__main__":
    B_EDGES = 256          # number of candidate edges (batch)
    IN_CH = 16             # node embedding width -> hidden = max(32, 8) = 32

    key = jax.random.PRNGKey(0)
    k_i, k_j, k_p = jax.random.split(key, 3)

    x_i = jax.random.normal(k_i, (B_EDGES, IN_CH), dtype=jnp.float32)
    x_j = jax.random.normal(k_j, (B_EDGES, IN_CH), dtype=jnp.float32)
    params = init_params(k_p, IN_CH)

    ref = link_predictor_reference(x_i, x_j, params)

    # f32 path (tight tolerance).
    fwd = jax.jit(link_predictor_forward)
    out = jax.block_until_ready(fwd(x_i, x_j, params))
    assert out.shape == (B_EDGES,)
    assert bool(jnp.all(jnp.isfinite(out)))
    assert jnp.allclose(out, ref, atol=1e-4, rtol=1e-4), \
        float(jnp.max(jnp.abs(out - ref)))

    # bf16-input path (recommended on v6e/v7x: halves HBM read traffic);
    # accumulation stays f32, so only input-rounding error remains.
    fwd_bf16 = jax.jit(
        lambda a, b, p: link_predictor_forward(a, b, p,
                                               compute_dtype=jnp.bfloat16))
    out_bf16 = jax.block_until_ready(fwd_bf16(x_i, x_j, params))
    assert out_bf16.shape == (B_EDGES,)
    assert bool(jnp.all(jnp.isfinite(out_bf16)))
    assert jnp.allclose(out_bf16, ref, atol=1e-1, rtol=1e-1), \
        float(jnp.max(jnp.abs(out_bf16 - ref)))

    print("KERNEL_OK")
</pallas_src>

<mosaic_0001>
module attributes {stable_mosaic.version = 11 : i64} {
  func.func @_link_predictor_kernel(%arg0: i32, %arg1: memref<128x16xf32, #tpu.memory_space<vmem>>, %arg2: memref<128x16xf32, #tpu.memory_space<vmem>>, %arg3: memref<16x32xf32, #tpu.memory_space<vmem>>, %arg4: memref<16x32xf32, #tpu.memory_space<vmem>>, %arg5: memref<1x32xf32, #tpu.memory_space<vmem>>, %arg6: memref<1x32xf32, #tpu.memory_space<vmem>>, %arg7: memref<1xf32, #tpu.memory_space<smem>>, %arg8: memref<1x128xf32, #tpu.memory_space<vmem>>) attributes {dimension_semantics = [#tpu.dimension_semantics<parallel>], iteration_bounds = array<i64: 2>, scalar_prefetch = 0 : i64, scratch_operands = 0 : i64, tpu.core_type = #tpu.core_type<tc>, window_params = [{transform_indices = @transform_0, window_bounds = array<i64: 128, 16>}, {transform_indices = @transform_1, window_bounds = array<i64: 128, 16>}, {pipeline_mode = #tpu.pipeline_mode<synchronous>, transform_indices = @transform_2, window_bounds = array<i64: 16, 32>}, {pipeline_mode = #tpu.pipeline_mode<synchronous>, transform_indices = @transform_3, window_bounds = array<i64: 16, 32>}, {pipeline_mode = #tpu.pipeline_mode<synchronous>, transform_indices = @transform_4, window_bounds = array<i64: 1, 32>}, {pipeline_mode = #tpu.pipeline_mode<synchronous>, transform_indices = @transform_5, window_bounds = array<i64: 1, 32>}, {transform_indices = @transform_6, window_bounds = array<i64: 1>}, {transform_indices = @transform_7, window_bounds = array<i64: 1, 128>}]} {
    %c0 = arith.constant 0 : index
    %c0_0 = arith.constant 0 : index
    %0 = vector.load %arg1[%c0, %c0_0] : memref<128x16xf32, #tpu.memory_space<vmem>>, vector<128x16xf32>
    %c0_1 = arith.constant 0 : index
    %c0_2 = arith.constant 0 : index
    %1 = vector.load %arg3[%c0_1, %c0_2] : memref<16x32xf32, #tpu.memory_space<vmem>>, vector<16x32xf32>
    %cst = arith.constant dense<0.000000e+00> : vector<128x32xf32>
    %2 = tpu.matmul %0, %1, %cst {dimension_numbers = #tpu.dot_dimension_numbers<[1], [0], [0], [1], [0, 0, 1, 1], [], []>} : vector<128x16xf32>, vector<16x32xf32>, vector<128x32xf32> -> vector<128x32xf32>
    %c0_3 = arith.constant 0 : index
    %c0_4 = arith.constant 0 : index
    %3 = vector.load %arg2[%c0_3, %c0_4] : memref<128x16xf32, #tpu.memory_space<vmem>>, vector<128x16xf32>
    %c0_5 = arith.constant 0 : index
    %c0_6 = arith.constant 0 : index
    %4 = vector.load %arg4[%c0_5, %c0_6] : memref<16x32xf32, #tpu.memory_space<vmem>>, vector<16x32xf32>
    %cst_7 = arith.constant dense<0.000000e+00> : vector<128x32xf32>
    %5 = tpu.matmul %3, %4, %cst_7 {dimension_numbers = #tpu.dot_dimension_numbers<[1], [0], [0], [1], [0, 0, 1, 1], [], []>} : vector<128x16xf32>, vector<16x32xf32>, vector<128x32xf32> -> vector<128x32xf32>
    %6 = arith.addf %2, %5 : vector<128x32xf32>
    %c0_8 = arith.constant 0 : index
    %c0_9 = arith.constant 0 : index
    %7 = vector.load %arg5[%c0_8, %c0_9] : memref<1x32xf32, #tpu.memory_space<vmem>>, vector<1x32xf32>
    %8 = vector.broadcast %7 : vector<1x32xf32> to vector<128x32xf32>
    %9 = arith.addf %6, %8 : vector<128x32xf32>
    %cst_10 = arith.constant 0.000000e+00 : f32
    %10 = vector.broadcast %cst_10 : f32 to vector<128x32xf32>
    %11 = arith.maximumf %9, %10 : vector<128x32xf32>
    %c0_11 = arith.constant 0 : index
    %c0_12 = arith.constant 0 : index
    %12 = vector.load %arg6[%c0_11, %c0_12] : memref<1x32xf32, #tpu.memory_space<vmem>>, vector<1x32xf32>
    %13 = vector.broadcast %12 : vector<1x32xf32> to vector<128x32xf32>
    %14 = arith.mulf %11, %13 : vector<128x32xf32>
    %cst_13 = arith.constant dense<0.000000e+00> : vector<128xf32>
    %15 = vector.multi_reduction <add>, %14, %cst_13 [1] : vector<128x32xf32> to vector<128xf32>
    %16 = vector.shape_cast %15 : vector<128xf32> to vector<128x1xf32>
    %17 = tpu.transpose %16, [1, 0] : vector<128x1xf32> -> vector<1x128xf32>
    %c0_14 = arith.constant 0 : index
    %18 = memref.load %arg7[%c0_14] : memref<1xf32, #tpu.memory_space<smem>>
    %19 = vector.broadcast %18 : f32 to vector<1x128xf32>
    %20 = arith.addf %17, %19 : vector<1x128xf32>
    %c0_15 = arith.constant 0 : index
    %c0_16 = arith.constant 0 : index
    %21 = vector.load %arg8[%c0_15, %c0_16] : memref<1x128xf32, #tpu.memory_space<vmem>>, vector<1x128xf32>
    tpu.vector_store %arg8[%c0_15, %c0_16], %20 {strides = array<i32>} : memref<1x128xf32, #tpu.memory_space<vmem>>, vector<1x128xf32>,
    return
  }
  func.func @transform_0(%arg0: i32) -> (i32, i32) {
    %c0_i32 = arith.constant 0 : i32
    %c0_i32_0 = arith.constant 0 : i32
    return %arg0, %c0_i32 : i32, i32
  }
  func.func @transform_1(%arg0: i32) -> (i32, i32) {
    %c0_i32 = arith.constant 0 : i32
    %c0_i32_0 = arith.constant 0 : i32
    return %arg0, %c0_i32 : i32, i32
  }
  func.func @transform_2(%arg0: i32) -> (i32, i32) {
    %c0_i32 = arith.constant 0 : i32
    %c0_i32_0 = arith.constant 0 : i32
    %c0_i32_1 = arith.constant 0 : i32
    return %c0_i32, %c0_i32_0 : i32, i32
  }
  func.func @transform_3(%arg0: i32) -> (i32, i32) {
    %c0_i32 = arith.constant 0 : i32
    %c0_i32_0 = arith.constant 0 : i32
    %c0_i32_1 = arith.constant 0 : i32
    return %c0_i32, %c0_i32_0 : i32, i32
  }
  func.func @transform_4(%arg0: i32) -> (i32, i32) {
    %c0_i32 = arith.constant 0 : i32
    %c0_i32_0 = arith.constant 0 : i32
    %c0_i32_1 = arith.constant 0 : i32
    return %c0_i32, %c0_i32_0 : i32, i32
  }
  func.func @transform_5(%arg0: i32) -> (i32, i32) {
    %c0_i32 = arith.constant 0 : i32
    %c0_i32_0 = arith.constant 0 : i32
    %c0_i32_1 = arith.constant 0 : i32
    return %c0_i32, %c0_i32_0 : i32, i32
  }
  func.func @transform_6(%arg0: i32) -> i32 {
    %c0_i32 = arith.constant 0 : i32
    %c0_i32_0 = arith.constant 0 : i32
    return %c0_i32 : i32
  }
  func.func @transform_7(%arg0: i32) -> (i32, i32) {
    %c0_i32 = arith.constant 0 : i32
    %c0_i32_0 = arith.constant 0 : i32
    return %c0_i32, %arg0 : i32, i32
  }
}

</mosaic_0001>

<llo_original>
// kernel: link_predictor_forward.1
$region0: #{link_predictor_forward.1}
  #allocation0 [shape = 'u32[]', space=smem, size = 0x4, offset = 0x4, fixed_abs, tag = 'smem constant byte address 0x4 - core index']
  #allocation1 [shape = 'u32[144,128]{1,0:T(1,128)}', space=vmem, size = 0x12000, scoped, tag = 'internal scratch']
  #allocation2 [shape = 'f32[1]{0:T(128)S(6)}', space=smem, size = 0x200, scoped, tag = 'scoped memory for link_predictor_forward.1']
  %s0 = inlined_call_operand.vmem [shape: f32[256,16], index: 0, kind: input, shape index: {}]
  %s1 = inlined_call_operand.vmem [shape: f32[256,16], index: 1, kind: input, shape index: {}]
  %s2 = inlined_call_operand.vmem [shape: f32[16,32], index: 2, kind: input, shape index: {}]
  %s3 = inlined_call_operand.vmem [shape: f32[16,32], index: 3, kind: input, shape index: {}]
  %s4 = inlined_call_operand.vmem [shape: f32[1,32], index: 4, kind: input, shape index: {}]
  %s5 = inlined_call_operand.vmem [shape: f32[1,32], index: 5, kind: input, shape index: {}]
  %s6 = inlined_call_operand.<no memory space> [shape: f32[1], index: 6, kind: input, shape index: {}]
  %s7 = inlined_call_operand.hbm [shape: f32[1,256], index: 7, kind: output, shape index: {}]
  %s8 = sld [smem:[#allocation0]]
  $region61: #{link_predictor_forward.1} parent=0
    _
  %s10 = ssub.s32 1, %s8
  %s11 = scalar_select 0, %s10, %s8
  %12 = sst [smem:[#allocation2]] %s6
  $region1: #{link_predictor_forward.1} parent=0
    #allocation3 [shape = 'u8[1024]{0}', space=vmem, size = 0x400, scoped, tag = 'output window, operand 0']
    #allocation4 [shape = 's32[2]{0}', space=sflag, size = 0x8, scoped, tag = 'scoped memory for link_predictor_forward.1']
    %13 = vsyncpa [#allocation4], 0
    %s14 = scalar_lea.sflag [#allocation4], 1
    %15 = vsyncpa %s14, 0
    loop: start=0, step=1, limit=4
    $region2: #{link_predictor_forward.1} parent=1 // loop_pre_header
      _
    $region3: #{link_predictor_forward.1} parent=1 // loop_header
      %s17 = sphi 0, %s21
      %p18 = scmp.ge.s32.totalorder %s17, 4
      %s27 = sphi 0, %s29
      %s30 = sphi 0, %s27
      %s31 = sphi 0, %s30
      %s47 = sphi 0, %s31
      %s53 = sphi 0, %s55
      %s56 = sphi 0, %s53
      %s57 = sphi 0, %s56
      %s73 = sphi 0, %s57
      %s77 = sphi 0, %s77
      %s79 = sphi 0, %s77
      %s80 = sphi 0, %s79
      %s94 = sphi 0, %s80
      %s98 = sphi 0, %s98
      %s100 = sphi 0, %s98
      %s101 = sphi 0, %s100
      %s115 = sphi 0, %s101
      %s119 = sphi 0, %s119
      %s121 = sphi 0, %s119
      %s122 = sphi 0, %s121
      %s136 = sphi 0, %s122
      %s140 = sphi 0, %s140
      %s142 = sphi 0, %s140
      %s143 = sphi 0, %s142
      %s157 = sphi 0, %s143
      %s161 = sphi 0, %s161
      %s163 = sphi 0, %s161
      %s164 = sphi 0, %s163
      %s178 = sphi 0, %s164
      %s184 = sphi 0, %s186
      %s187 = sphi 0, %s184
      %s188 = sphi 0, %s187
      %s204 = sphi 0, %s188
    $region4: #{link_predictor_forward.1} parent=1 // loop_header_branch
      %20 = sbr.rel (%p18) target = $region8
    $region5: #{link_predictor_forward.1} parent=1 // loop_body
      %s22 = ssub.s32 %s17, 1
      %s23 = ssub.s32 %s17, 2
      %s24 = sadd.s32 %s17, 1
      %s25 = ssub.s32 %s17, %s24
      %p26 = scmp.eq.s32.totalorder %s25, 0
      %s28 = sadd.s32 %s27, 1
      %s29 = scalar_select %p26, %s27, %s28
      %p32 = pneg %p26
      %p33 = scmp.eq.s32.totalorder %s17, 1
      %p34 = por %p32, %p33
      %p35 = scmp.ne.s32.totalorder %s27, %s30
      %p36 = scmp.eq.s32.totalorder %s17, 0
      %p37 = por %p35, %p36
      %p38 = scmp.ne.s32.totalorder %s27, %s30
      %p39 = scmp.eq.s32.totalorder %s22, 1
      %p40 = por %p38, %p39
      %p41 = scmp.ne.s32.totalorder %s30, %s31
      %p42 = scmp.eq.s32.totalorder %s22, 0
      %p43 = por %p41, %p42
      %p44 = scmp.ne.s32.totalorder %s30, %s31
      %p45 = scmp.eq.s32.totalorder %s23, 1
      %p46 = por %p44, %p45
      %p48 = scmp.ne.s32.totalorder %s31, %s47
      %p49 = scmp.eq.s32.totalorder %s23, 0
      %p50 = por %p48, %p49
      %s51 = ssub.s32 %s17, %s24
      %p52 = scmp.eq.s32.totalorder %s51, 0
      %s54 = sadd.s32 %s53, 1
      %s55 = scalar_select %p52, %s53, %s54
      %p58 = pneg %p52
      %p59 = scmp.eq.s32.totalorder %s17, 1
      %p60 = por %p58, %p59
      %p61 = scmp.ne.s32.totalorder %s53, %s56
      %p62 = scmp.eq.s32.totalorder %s17, 0
      %p63 = por %p61, %p62
      %p64 = scmp.ne.s32.totalorder %s53, %s56
      %p65 = scmp.eq.s32.totalorder %s22, 1
      %p66 = por %p64, %p65
      %p67 = scmp.ne.s32.totalorder %s56, %s57
      %p68 = scmp.eq.s32.totalorder %s22, 0
      %p69 = por %p67, %p68
      %p70 = scmp.ne.s32.totalorder %s56, %s57
      %p71 = scmp.eq.s32.totalorder %s23, 1
      %p72 = por %p70, %p71
      %p74 = scmp.ne.s32.totalorder %s57, %s73
      %p75 = scmp.eq.s32.totalorder %s23, 0
      %p76 = por %p74, %p75
      %s78 = sadd.s32 %s77, 1
      %p81 = scmp.eq.s32.totalorder %s17, 1
      %p82 = scmp.ne.s32.totalorder %s77, %s79
      %p83 = scmp.eq.s32.totalorder %s17, 0
      %p84 = por %p82, %p83
      %p85 = scmp.ne.s32.totalorder %s77, %s79
      %p86 = scmp.eq.s32.totalorder %s22, 1
      %p87 = por %p85, %p86
      %p88 = scmp.ne.s32.totalorder %s79, %s80
      %p89 = scmp.eq.s32.totalorder %s22, 0
      %p90 = por %p88, %p89
      %p91 = scmp.ne.s32.totalorder %s79, %s80
      %p92 = scmp.eq.s32.totalorder %s23, 1
      %p93 = por %p91, %p92
      %p95 = scmp.ne.s32.totalorder %s80, %s94
      %p96 = scmp.eq.s32.totalorder %s23, 0
      %p97 = por %p95, %p96
      %s99 = sadd.s32 %s98, 1
      %p102 = scmp.eq.s32.totalorder %s17, 1
      %p103 = scmp.ne.s32.totalorder %s98, %s100
      %p104 = scmp.eq.s32.totalorder %s17, 0
      %p105 = por %p103, %p104
      %p106 = scmp.ne.s32.totalorder %s98, %s100
      %p107 = scmp.eq.s32.totalorder %s22, 1
      %p108 = por %p106, %p107
      %p109 = scmp.ne.s32.totalorder %s100, %s101
      %p110 = scmp.eq.s32.totalorder %s22, 0
      %p111 = por %p109, %p110
      %p112 = scmp.ne.s32.totalorder %s100, %s101
      %p113 = scmp.eq.s32.totalorder %s23, 1
      %p114 = por %p112, %p113
      %p116 = scmp.ne.s32.totalorder %s101, %s115
      %p117 = scmp.eq.s32.totalorder %s23, 0
      %p118 = por %p116, %p117
      %s120 = sadd.s32 %s119, 1
      %p123 = scmp.eq.s32.totalorder %s17, 1
      %p124 = scmp.ne.s32.totalorder %s119, %s121
      %p125 = scmp.eq.s32.totalorder %s17, 0
      %p126 = por %p124, %p125
      %p127 = scmp.ne.s32.totalorder %s119, %s121
      %p128 = scmp.eq.s32.totalorder %s22, 1
      %p129 = por %p127, %p128
      %p130 = scmp.ne.s32.totalorder %s121, %s122
      %p131 = scmp.eq.s32.totalorder %s22, 0
      %p132 = por %p130, %p131
      %p133 = scmp.ne.s32.totalorder %s121, %s122
      %p134 = scmp.eq.s32.totalorder %s23, 1
      %p135 = por %p133, %p134
      %p137 = scmp.ne.s32.totalorder %s122, %s136
      %p138 = scmp.eq.s32.totalorder %s23, 0
      %p139 = por %p137, %p138
      %s141 = sadd.s32 %s140, 1
      %p144 = scmp.eq.s32.totalorder %s17, 1
      %p145 = scmp.ne.s32.totalorder %s140, %s142
      %p146 = scmp.eq.s32.totalorder %s17, 0
      %p147 = por %p145, %p146
      %p148 = scmp.ne.s32.totalorder %s140, %s142
      %p149 = scmp.eq.s32.totalorder %s22, 1
      %p150 = por %p148, %p149
      %p151 = scmp.ne.s32.totalorder %s142, %s143
      %p152 = scmp.eq.s32.totalorder %s22, 0
      %p153 = por %p151, %p152
      %p154 = scmp.ne.s32.totalorder %s142, %s143
      %p155 = scmp.eq.s32.totalorder %s23, 1
      %p156 = por %p154, %p155
      %p158 = scmp.ne.s32.totalorder %s143, %s157
      %p159 = scmp.eq.s32.totalorder %s23, 0
      %p160 = por %p158, %p159
      %s162 = sadd.s32 %s161, 1
      %p165 = scmp.eq.s32.totalorder %s17, 1
      %p166 = scmp.ne.s32.totalorder %s161, %s163
      %p167 = scmp.eq.s32.totalorder %s17, 0
      %p168 = por %p166, %p167
      %p169 = scmp.ne.s32.totalorder %s161, %s163
      %p170 = scmp.eq.s32.totalorder %s22, 1
      %p171 = por %p169, %p170
      %p172 = scmp.ne.s32.totalorder %s163, %s164
      %p173 = scmp.eq.s32.totalorder %s22, 0
      %p174 = por %p172, %p173
      %p175 = scmp.ne.s32.totalorder %s163, %s164
      %p176 = scmp.eq.s32.totalorder %s23, 1
      %p177 = por %p175, %p176
      %p179 = scmp.ne.s32.totalorder %s164, %s178
      %p180 = scmp.eq.s32.totalorder %s23, 0
      %p181 = por %p179, %p180
      %s182 = ssub.s32 %s17, %s24
      %p183 = scmp.eq.s32.totalorder %s182, 0
      %s185 = sadd.s32 %s184, 1
      %s186 = scalar_select %p183, %s184, %s185
      %p189 = pneg %p183
      %p190 = scmp.eq.s32.totalorder %s17, 1
      %p191 = por %p189, %p190
      %p192 = scmp.ne.s32.totalorder %s184, %s187
      %p193 = scmp.eq.s32.totalorder %s17, 0
      %p194 = por %p192, %p193
      %p195 = scmp.ne.s32.totalorder %s184, %s187
      %p196 = scmp.eq.s32.totalorder %s22, 1
      %p197 = por %p195, %p196
      %p198 = scmp.ne.s32.totalorder %s187, %s188
      %p199 = scmp.eq.s32.totalorder %s22, 0
      %p200 = por %p198, %p199
      %p201 = scmp.ne.s32.totalorder %s187, %s188
      %p202 = scmp.eq.s32.totalorder %s23, 1
      %p203 = por %p201, %p202
      %p205 = scmp.ne.s32.totalorder %s188, %s204
      %p206 = scmp.eq.s32.totalorder %s23, 0
      %p207 = por %p205, %p206
      %p208 = scmp.le.s32.totalorder 1, %s17
      %p209 = scmp.lt.s32.totalorder %s17, 3
      %p210 = pnand %p208, %p209
      %p211 = pneg %p210
      // Predicated region
      $region9: #{link_predictor_forward.1} parent=5 // pred_check
        _
      $region10: #{link_predictor_forward.1} parent=5 // pred_check_branch
        %213 = sbr.rel (%p210) target = $region12
      $region11: #{link_predictor_forward.1} parent=5 // pred_region
        %s214 = ssub.s32 %s17, 1
        // Predicated region
        $region13: #{link_predictor_forward.1} parent=11 // pred_check
          %p215 = pneg %p90
        $region14: #{link_predictor_forward.1} parent=11 // pred_check_branch
          %217 = sbr.rel (%p215) target = $region16
        $region15: #{link_predictor_forward.1} parent=11 // pred_region
          _
        $region16: #{link_predictor_forward.1} parent=11 // pred_fallthru
          _
        // Predicated region
        $region17: #{link_predictor_forward.1} parent=11 // pred_check
          %p218 = pneg %p111
        $region18: #{link_predictor_forward.1} parent=11 // pred_check_branch
          %220 = sbr.rel (%p218) target = $region20
        $region19: #{link_predictor_forward.1} parent=11 // pred_region
          _
        $region20: #{link_predictor_forward.1} parent=11 // pred_fallthru
          _
        // Predicated region
        $region21: #{link_predictor_forward.1} parent=11 // pred_check
          %p221 = pneg %p132
        $region22: #{link_predictor_forward.1} parent=11 // pred_check_branch
          %223 = sbr.rel (%p221) target = $region24
        $region23: #{link_predictor_forward.1} parent=11 // pred_region
          _
        $region24: #{link_predictor_forward.1} parent=11 // pred_fallthru
          _
        // Predicated region
        $region25: #{link_predictor_forward.1} parent=11 // pred_check
          %p224 = pneg %p153
        $region26: #{link_predictor_forward.1} parent=11 // pred_check_branch
          %226 = sbr.rel (%p224) target = $region28
        $region27: #{link_predictor_forward.1} parent=11 // pred_region
          _
        $region28: #{link_predictor_forward.1} parent=11 // pred_fallthru
          _
        // Predicated region
        $region29: #{link_predictor_forward.1} parent=11 // pred_check
          %p227 = pneg %p174
        $region30: #{link_predictor_forward.1} parent=11 // pred_check_branch
          %229 = sbr.rel (%p227) target = $region32
        $region31: #{link_predictor_forward.1} parent=11 // pred_region
          _
        $region32: #{link_predictor_forward.1} parent=11 // pred_fallthru
          _
      $region12: #{link_predictor_forward.1} parent=5 // pred_fallthru
        _
      %p230 = scmp.lt.s32.totalorder %s17, 2
      // Predicated region
      $region33: #{link_predictor_forward.1} parent=5 // pred_check
        %p231 = pneg %p230
      $region34: #{link_predictor_forward.1} parent=5 // pred_check_branch
        %233 = sbr.rel (%p231) target = $region36
      $region35: #{link_predictor_forward.1} parent=5 // pred_region
        // Predicated region
        $region37: #{link_predictor_forward.1} parent=35 // pred_check
          %p234 = pneg %p37
        $region38: #{link_predictor_forward.1} parent=35 // pred_check_branch
          %236 = sbr.rel (%p234) target = $region40
        $region39: #{link_predictor_forward.1} parent=35 // pred_region
          %s237 = smul.u32 16, %s17
          %p238 = scmp.lt.s32.totalorder %s237, 31
          %s239 = scalar_select %p238, %s237, 31
          %s240 = smul.addr %s239, 8
          %s241 = scalar_lea.vmem %s0, %s240
          %s242 = smul.u32 16, %s17
        $region40: #{link_predictor_forward.1} parent=35 // pred_fallthru
          _
        // Predicated region
        $region41: #{link_predictor_forward.1} parent=35 // pred_check
          %p243 = pneg %p63
        $region42: #{link_predictor_forward.1} parent=35 // pred_check_branch
          %245 = sbr.rel (%p243) target = $region44
        $region43: #{link_predictor_forward.1} parent=35 // pred_region
          %s246 = smul.u32 16, %s17
          %p247 = scmp.lt.s32.totalorder %s246, 31
          %s248 = scalar_select %p247, %s246, 31
          %s249 = smul.addr %s248, 8
          %s250 = scalar_lea.vmem %s1, %s249
          %s251 = smul.u32 16, %s17
        $region44: #{link_predictor_forward.1} parent=35 // pred_fallthru
          _
      $region36: #{link_predictor_forward.1} parent=5 // pred_fallthru
        _
      %p252 = scmp.le.s32.totalorder 1, %s17
      %p253 = scmp.lt.s32.totalorder %s17, 3
      %p254 = pnand %p252, %p253
      %p255 = pneg %p254
      // Predicated region
      $region45: #{link_predictor_forward.1} parent=5 // pred_check
        _
      $region46: #{link_predictor_forward.1} parent=5 // pred_check_branch
        %257 = sbr.rel (%p254) target = $region48
      $region47: #{link_predictor_forward.1} parent=5 // pred_region
        %s258 = ssub.s32 %s17, 1
        %s259 = smul.u32 16, %s22
        %p260 = scmp.lt.s32.totalorder %s259, 31
        %s261 = scalar_select %p260, %s259, 31
        %s262 = smul.addr %s261, 8
        %s263 = scalar_lea.vmem %s0, %s262
        %p264 = pneg %p43
        %p265 = pneg %p40
        %s266 = smul.u32 16, %s22
        %p267 = scmp.lt.s32.totalorder %s266, 31
        %s268 = scalar_select %p267, %s266, 31
        %s269 = smul.addr %s268, 8
        %s270 = scalar_lea.vmem %s1, %s269
        %p271 = pneg %p69
        %p272 = pneg %p66
        %p273 = pneg %p90
        %p274 = pneg %p87
        %p275 = pneg %p111
        %p276 = pneg %p108
        %p277 = pneg %p132
        %p278 = pneg %p129
        %p279 = pneg %p153
        %p280 = pneg %p150
        %p281 = pneg %p174
        %p282 = pneg %p171
        %p283 = pneg %p200
        %p284 = pneg %p197
        %s285 = sand.u32 %s187, 1
        %s286 = scalar_lea.sflag [#allocation4], %s285
        %s287 = sand.u32 %s187, 1
        %s288 = scalar_lea.vmem [#allocation3], %s287
        %s289 = smul.u32 16, %s22
        %p290 = scmp.lt.s32.totalorder %s289, 31
        %s291 = scalar_select %p290, %s289, 31
        %s292 = smul.addr %s291, 8
        %s293 = scalar_lea.vmem %s0, %s292
        %s294 = smul.u32 16, %s22
        %s295 = smul.u32 16, %s22
        %p296 = scmp.lt.s32.totalorder %s295, 31
        %s297 = scalar_select %p296, %s295, 31
        %s298 = smul.addr %s297, 8
        %s299 = scalar_lea.vmem %s1, %s298
        %s300 = smul.u32 16, %s22
        %v301 = vld [vmem:[%s293] sm:$0xff]
        %v302 = vld [vmem:[%s293 + $0x8] sm:$0xff]
        %v303 = vld [vmem:[%s293 + $0x10] sm:$0xff]
        %v304 = vld [vmem:[%s293 + $0x18] sm:$0xff]
        %v305 = vld [vmem:[%s293 + $0x20] sm:$0xff]
        %v306 = vld [vmem:[%s293 + $0x28] sm:$0xff]
        %v307 = vld [vmem:[%s293 + $0x30] sm:$0xff]
        %v308 = vld [vmem:[%s293 + $0x38] sm:$0xff]
        %v309 = vld [vmem:[%s293 + $0x40] sm:$0xff]
        %v310 = vld [vmem:[%s293 + $0x48] sm:$0xff]
        %v311 = vld [vmem:[%s293 + $0x50] sm:$0xff]
        %v312 = vld [vmem:[%s293 + $0x58] sm:$0xff]
        %v313 = vld [vmem:[%s293 + $0x60] sm:$0xff]
        %v314 = vld [vmem:[%s293 + $0x68] sm:$0xff]
        %v315 = vld [vmem:[%s293 + $0x70] sm:$0xff]
        %v316 = vld [vmem:[%s293 + $0x78] sm:$0xff]
        %v317 = vld [vmem:[%s2] sm:$0xff]
        %v318 = vld [vmem:[%s2 + $0x8] sm:$0xff]
        %v319 = vld [vmem:[%s299] sm:$0xff]
        %v320 = vld [vmem:[%s299 + $0x8] sm:$0xff]
        %v321 = vld [vmem:[%s299 + $0x10] sm:$0xff]
        %v322 = vld [vmem:[%s299 + $0x18] sm:$0xff]
        %v323 = vld [vmem:[%s299 + $0x20] sm:$0xff]
        %v324 = vld [vmem:[%s299 + $0x28] sm:$0xff]
        %v325 = vld [vmem:[%s299 + $0x30] sm:$0xff]
        %v326 = vld [vmem:[%s299 + $0x38] sm:$0xff]
        %v327 = vld [vmem:[%s299 + $0x40] sm:$0xff]
        %v328 = vld [vmem:[%s299 + $0x48] sm:$0xff]
        %v329 = vld [vmem:[%s299 + $0x50] sm:$0xff]
        %v330 = vld [vmem:[%s299 + $0x58] sm:$0xff]
        %v331 = vld [vmem:[%s299 + $0x60] sm:$0xff]
        %v332 = vld [vmem:[%s299 + $0x68] sm:$0xff]
        %v333 = vld [vmem:[%s299 + $0x70] sm:$0xff]
        %v334 = vld [vmem:[%s299 + $0x78] sm:$0xff]
        %v335 = vld [vmem:[%s3] sm:$0xff]
        %v336 = vld [vmem:[%s3 + $0x8] sm:$0xff]
        %vm337 = vcmask 130048
        %v339 = vsel %vm337, %v319, 0
        %v342 = vsel %vm337, %v320, 0
        %v345 = vsel %vm337, %v321, 0
        %v348 = vsel %vm337, %v322, 0
        %v351 = vsel %vm337, %v323, 0
        %v354 = vsel %vm337, %v324, 0
        %v357 = vsel %vm337, %v325, 0
        %v360 = vsel %vm337, %v326, 0
        %v363 = vsel %vm337, %v327, 0
        %v366 = vsel %vm337, %v328, 0
        %v369 = vsel %vm337, %v329, 0
        %v372 = vsel %vm337, %v330, 0
        %v375 = vsel %vm337, %v331, 0
        %v378 = vsel %vm337, %v332, 0
        %v381 = vsel %vm337, %v333, 0
        %v384 = vsel %vm337, %v334, 0
        %386 = vmatprep.subr.mxu0 0.0
        %387 = vmatpush1.msra.mxu0 %v335
        %388 = vmatprep.subr.mxu0 0.0
        %389 = vmatpush1.msra.mxu0 %v336
        %390 = vmatprep.subr.mxu0 0.0
        %391 = vmatpush1.msra.mxu0 0.0
        %392 = vmatprep.subr.mxu0 0.0
        %393 = vmatpush1.msra.mxu0 0.0
        %394 = vmatprep.subr.mxu0 0.0
        %395 = vmatpush1.msra.mxu0 0.0
        %396 = vmatprep.subr.mxu0 0.0
        %397 = vmatpush1.msra.mxu0 0.0
        %398 = vmatprep.subr.mxu0 0.0
        %399 = vmatpush1.msra.mxu0 0.0
        %400 = vmatprep.subr.mxu0 0.0
        %401 = vmatpush1.msra.mxu0 0.0
        %402 = vmatprep.subr.mxu0 0.0
        %403 = vmatpush1.msra.mxu0 0.0
        %404 = vmatprep.subr.mxu0 0.0
        %405 = vmatpush1.msra.mxu0 0.0
        %406 = vmatprep.subr.mxu0 0.0
        %407 = vmatpush1.msra.mxu0 0.0
        %408 = vmatprep.subr.mxu0 0.0
        %409 = vmatpush1.msra.mxu0 0.0
        %410 = vmatprep.subr.mxu0 0.0
        %411 = vmatpush1.msra.mxu0 0.0
        %412 = vmatprep.subr.mxu0 0.0
        %413 = vmatpush1.msra.mxu0 0.0
        %414 = vmatprep.subr.mxu0 0.0
        %415 = vmatpush1.msra.mxu0 0.0
        %416 = vmatprep.subr.mxu0 0.0
        %417 = vmatpush1.msra.mxu0 0.0
        %418 = vmatprep.subr.mxu0 0.0
        %419 = vmatpush1.msra.mxu0 0.0
        %420 = vmatprep.subr.mxu0 0.0
        %421 = vmatpush1.msra.mxu0 0.0
        %422 = vmatprep.subr.mxu0 0.0
        %423 = vmatpush1.msra.mxu0 0.0
        %424 = vmatprep.subr.mxu0 0.0
        %425 = vmatpush1.msra.mxu0 0.0
        %426 = vmatprep.subr.mxu0 0.0
        %427 = vmatpush1.msra.mxu0 0.0
        %428 = vmatprep.subr.mxu0 0.0
        %429 = vmatpush1.msra.mxu0 0.0
        %430 = vmatprep.subr.mxu0 0.0
        %431 = vmatpush1.msra.mxu0 0.0
        %432 = vmatprep.subr.mxu0 0.0
        %433 = vmatpush1.msra.mxu0 0.0
        %434 = vmatprep.subr.mxu0 0.0
        %435 = vmatpush1.msra.mxu0 0.0
        %436 = vmatprep.subr.mxu0 0.0
        %437 = vmatpush1.msra.mxu0 0.0
        %438 = vmatprep.subr.mxu0 0.0
        %439 = vmatpush1.msra.mxu0 0.0
        %440 = vmatprep.subr.mxu0 0.0
        %441 = vmatpush1.msra.mxu0 0.0
        %442 = vmatprep.subr.mxu0 0.0
        %443 = vmatpush1.msra.mxu0 0.0
        %444 = vmatprep.subr.mxu0 0.0
        %445 = vmatpush1.msra.mxu0 0.0
        %446 = vmatprep.subr.mxu0 0.0
        %447 = vmatpush1.msra.mxu0 0.0
        %448 = vmatprep.subr.mxu0 0.0
        %449 = vmatpush1.msra.mxu0 0.0
        %450 = vmatprep.mubr.f32.mxu0 0.0
        %451 = vmatmul.mubr.f32.gmra.mrb[0].mxu0 %v339
        %v452 = vpop.f32.mrb[0].mxu0
        %v453 = vadd.f32 0.0, %v452
        %v454 = vpop.f32.mrb[0].mxu0
        %455 = vmatprep.mubr.f32.mxu0 0.0
        %456 = vmatmul.mubr.f32.gmra.mrb[0].mxu0 %v342
        %v457 = vpop.f32.mrb[0].mxu0
        %v458 = vadd.f32 0.0, %v457
        %v459 = vpop.f32.mrb[0].mxu0
        %460 = vmatprep.mubr.f32.mxu0 0.0
        %461 = vmatmul.mubr.f32.gmra.mrb[0].mxu0 %v345
        %v462 = vpop.f32.mrb[0].mxu0
        %v463 = vadd.f32 0.0, %v462
        %v464 = vpop.f32.mrb[0].mxu0
        %465 = vmatprep.mubr.f32.mxu0 0.0
        %466 = vmatmul.mubr.f32.gmra.mrb[0].mxu0 %v348
        %v467 = vpop.f32.mrb[0].mxu0
        %v468 = vadd.f32 0.0, %v467
        %v469 = vpop.f32.mrb[0].mxu0
        %470 = vmatprep.mubr.f32.mxu0 0.0
        %471 = vmatmul.mubr.f32.gmra.mrb[0].mxu0 %v351
        %v472 = vpop.f32.mrb[0].mxu0
        %v473 = vadd.f32 0.0, %v472
        %v474 = vpop.f32.mrb[0].mxu0
        %475 = vmatprep.mubr.f32.mxu0 0.0
        %476 = vmatmul.mubr.f32.gmra.mrb[0].mxu0 %v354
        %v477 = vpop.f32.mrb[0].mxu0
        %v478 = vadd.f32 0.0, %v477
        %v479 = vpop.f32.mrb[0].mxu0
        %480 = vmatprep.mubr.f32.mxu0 0.0
        %481 = vmatmul.mubr.f32.gmra.mrb[0].mxu0 %v357
        %v482 = vpop.f32.mrb[0].mxu0
        %v483 = vadd.f32 0.0, %v482
        %v484 = vpop.f32.mrb[0].mxu0
        %485 = vmatprep.mubr.f32.mxu0 0.0
        %486 = vmatmul.mubr.f32.gmra.mrb[0].mxu0 %v360
        %v487 = vpop.f32.mrb[0].mxu0
        %v488 = vadd.f32 0.0, %v487
        %v489 = vpop.f32.mrb[0].mxu0
        %490 = vmatprep.mubr.f32.mxu0 0.0
        %491 = vmatmul.mubr.f32.gmra.mrb[0].mxu0 %v363
        %v492 = vpop.f32.mrb[0].mxu0
        %v493 = vadd.f32 0.0, %v492
        %v494 = vpop.f32.mrb[0].mxu0
        %495 = vmatprep.mubr.f32.mxu0 0.0
        %496 = vmatmul.mubr.f32.gmra.mrb[0].mxu0 %v366
        %v497 = vpop.f32.mrb[0].mxu0
        %v498 = vadd.f32 0.0, %v497
        %v499 = vpop.f32.mrb[0].mxu0
        %500 = vmatprep.mubr.f32.mxu0 0.0
        %501 = vmatmul.mubr.f32.gmra.mrb[0].mxu0 %v369
        %v502 = vpop.f32.mrb[0].mxu0
        %v503 = vadd.f32 0.0, %v502
        %v504 = vpop.f32.mrb[0].mxu0
        %505 = vmatprep.mubr.f32.mxu0 0.0
        %506 = vmatmul.mubr.f32.gmra.mrb[0].mxu0 %v372
        %v507 = vpop.f32.mrb[0].mxu0
        %v508 = vadd.f32 0.0, %v507
        %v509 = vpop.f32.mrb[0].mxu0
        %510 = vmatprep.mubr.f32.mxu0 0.0
        %511 = vmatmul.mubr.f32.gmra.mrb[0].mxu0 %v375
        %v512 = vpop.f32.mrb[0].mxu0
        %v513 = vadd.f32 0.0, %v512
        %v514 = vpop.f32.mrb[0].mxu0
        %515 = vmatprep.mubr.f32.mxu0 0.0
        %516 = vmatmul.mubr.f32.gmra.mrb[0].mxu0 %v378
        %v517 = vpop.f32.mrb[0].mxu0
        %v518 = vadd.f32 0.0, %v517
        %v519 = vpop.f32.mrb[0].mxu0
        %520 = vmatprep.mubr.f32.mxu0 0.0
        %521 = vmatmul.mubr.f32.gmra.mrb[0].mxu0 %v381
        %v522 = vpop.f32.mrb[0].mxu0
        %v523 = vadd.f32 0.0, %v522
        %v524 = vpop.f32.mrb[0].mxu0
        %525 = vmatprep.mubr.f32.mxu0 0.0
        %526 = vmatmul.mubr.f32.gmra.mrb[0].mxu0 %v384
        %v527 = vpop.f32.mrb[0].mxu0
        %v528 = vadd.f32 0.0, %v527
        %v529 = vpop.f32.mrb[0].mxu0
        %530 = vdwg.mxu0
        %v532 = vsel %vm337, %v301, 0
        %v535 = vsel %vm337, %v302, 0
        %v538 = vsel %vm337, %v303, 0
        %v541 = vsel %vm337, %v304, 0
        %v544 = vsel %vm337, %v305, 0
        %v547 = vsel %vm337, %v306, 0
        %v550 = vsel %vm337, %v307, 0
        %v553 = vsel %vm337, %v308, 0
        %v556 = vsel %vm337, %v309, 0
        %v559 = vsel %vm337, %v310, 0
        %v562 = vsel %vm337, %v311, 0
        %v565 = vsel %vm337, %v312, 0
        %v568 = vsel %vm337, %v313, 0
        %v571 = vsel %vm337, %v314, 0
        %v574 = vsel %vm337, %v315, 0
        %v577 = vsel %vm337, %v316, 0
        %579 = vmatprep.subr.mxu0 0.0
        %580 = vmatpush1.msra.mxu0 %v317
        %581 = vmatprep.subr.mxu0 0.0
        %582 = vmatpush1.msra.mxu0 %v318
        %583 = vmatprep.subr.mxu0 0.0
        %584 = vmatpush1.msra.mxu0 0.0
        %585 = vmatprep.subr.mxu0 0.0
        %586 = vmatpush1.msra.mxu0 0.0
        %587 = vmatprep.subr.mxu0 0.0
        %588 = vmatpush1.msra.mxu0 0.0
        %589 = vmatprep.subr.mxu0 0.0
        %590 = vmatpush1.msra.mxu0 0.0
        %591 = vmatprep.subr.mxu0 0.0
        %592 = vmatpush1.msra.mxu0 0.0
        %593 = vmatprep.subr.mxu0 0.0
        %594 = vmatpush1.msra.mxu0 0.0
        %595 = vmatprep.subr.mxu0 0.0
        %596 = vmatpush1.msra.mxu0 0.0
        %597 = vmatprep.subr.mxu0 0.0
        %598 = vmatpush1.msra.mxu0 0.0
        %599 = vmatprep.subr.mxu0 0.0
        %600 = vmatpush1.msra.mxu0 0.0
        %601 = vmatprep.subr.mxu0 0.0
        %602 = vmatpush1.msra.mxu0 0.0
        %603 = vmatprep.subr.mxu0 0.0
        %604 = vmatpush1.msra.mxu0 0.0
        %605 = vmatprep.subr.mxu0 0.0
        %606 = vmatpush1.msra.mxu0 0.0
        %607 = vmatprep.subr.mxu0 0.0
        %608 = vmatpush1.msra.mxu0 0.0
        %609 = vmatprep.subr.mxu0 0.0
        %610 = vmatpush1.msra.mxu0 0.0
        %611 = vmatprep.subr.mxu0 0.0
        %612 = vmatpush1.msra.mxu0 0.0
        %613 = vmatprep.subr.mxu0 0.0
        %614 = vmatpush1.msra.mxu0 0.0
        %615 = vmatprep.subr.mxu0 0.0
        %616 = vmatpush1.msra.mxu0 0.0
        %617 = vmatprep.subr.mxu0 0.0
        %618 = vmatpush1.msra.mxu0 0.0
        %619 = vmatprep.subr.mxu0 0.0
        %620 = vmatpush1.msra.mxu0 0.0
        %621 = vmatprep.subr.mxu0 0.0
        %622 = vmatpush1.msra.mxu0 0.0
        %623 = vmatprep.subr.mxu0 0.0
        %624 = vmatpush1.msra.mxu0 0.0
        %625 = vmatprep.subr.mxu0 0.0
        %626 = vmatpush1.msra.mxu0 0.0
        %627 = vmatprep.subr.mxu0 0.0
        %628 = vmatpush1.msra.mxu0 0.0
        %629 = vmatprep.subr.mxu0 0.0
        %630 = vmatpush1.msra.mxu0 0.0
        %631 = vmatprep.subr.mxu0 0.0
        %632 = vmatpush1.msra.mxu0 0.0
        %633 = vmatprep.subr.mxu0 0.0
        %634 = vmatpush1.msra.mxu0 0.0
        %635 = vmatprep.subr.mxu0 0.0
        %636 = vmatpush1.msra.mxu0 0.0
        %637 = vmatprep.subr.mxu0 0.0
        %638 = vmatpush1.msra.mxu0 0.0
        %639 = vmatprep.subr.mxu0 0.0
        %640 = vmatpush1.msra.mxu0 0.0
        %641 = vmatprep.subr.mxu0 0.0
        %642 = vmatpush1.msra.mxu0 0.0
        %643 = vmatprep.mubr.f32.mxu0 0.0
        %644 = vmatmul.mubr.f32.gmra.mrb[0].mxu0 %v532
        %v645 = vpop.f32.mrb[0].mxu0
        %v646 = vadd.f32 %v453, %v645
        %v647 = vpop.f32.mrb[0].mxu0
        %648 = vmatprep.mubr.f32.mxu0 0.0
        %649 = vmatmul.mubr.f32.gmra.mrb[0].mxu0 %v535
        %v650 = vpop.f32.mrb[0].mxu0
        %v651 = vadd.f32 %v458, %v650
        %v652 = vpop.f32.mrb[0].mxu0
        %653 = vmatprep.mubr.f32.mxu0 0.0
        %654 = vmatmul.mubr.f32.gmra.mrb[0].mxu0 %v538
        %v655 = vpop.f32.mrb[0].mxu0
        %v656 = vadd.f32 %v463, %v655
        %v657 = vpop.f32.mrb[0].mxu0
        %658 = vmatprep.mubr.f32.mxu0 0.0
        %659 = vmatmul.mubr.f32.gmra.mrb[0].mxu0 %v541
        %v660 = vpop.f32.mrb[0].mxu0
        %v661 = vadd.f32 %v468, %v660
        %v662 = vpop.f32.mrb[0].mxu0
        %663 = vmatprep.mubr.f32.mxu0 0.0
        %664 = vmatmul.mubr.f32.gmra.mrb[0].mxu0 %v544
        %v665 = vpop.f32.mrb[0].mxu0
        %v666 = vadd.f32 %v473, %v665
        %v667 = vpop.f32.mrb[0].mxu0
        %668 = vmatprep.mubr.f32.mxu0 0.0
        %669 = vmatmul.mubr.f32.gmra.mrb[0].mxu0 %v547
        %v670 = vpop.f32.mrb[0].mxu0
        %v671 = vadd.f32 %v478, %v670
        %v672 = vpop.f32.mrb[0].mxu0
        %673 = vmatprep.mubr.f32.mxu0 0.0
        %674 = vmatmul.mubr.f32.gmra.mrb[0].mxu0 %v550
        %v675 = vpop.f32.mrb[0].mxu0
        %v676 = vadd.f32 %v483, %v675
        %v677 = vpop.f32.mrb[0].mxu0
        %678 = vmatprep.mubr.f32.mxu0 0.0
        %679 = vmatmul.mubr.f32.gmra.mrb[0].mxu0 %v553
        %v680 = vpop.f32.mrb[0].mxu0
        %v681 = vadd.f32 %v488, %v680
        %v682 = vpop.f32.mrb[0].mxu0
        %683 = vmatprep.mubr.f32.mxu0 0.0
        %684 = vmatmul.mubr.f32.gmra.mrb[0].mxu0 %v556
        %v685 = vpop.f32.mrb[0].mxu0
        %v686 = vadd.f32 %v493, %v685
        %v687 = vpop.f32.mrb[0].mxu0
        %688 = vmatprep.mubr.f32.mxu0 0.0
        %689 = vmatmul.mubr.f32.gmra.mrb[0].mxu0 %v559
        %v690 = vpop.f32.mrb[0].mxu0
        %v691 = vadd.f32 %v498, %v690
        %v692 = vpop.f32.mrb[0].mxu0
        %693 = vmatprep.mubr.f32.mxu0 0.0
        %694 = vmatmul.mubr.f32.gmra.mrb[0].mxu0 %v562
        %v695 = vpop.f32.mrb[0].mxu0
        %v696 = vadd.f32 %v503, %v695
        %v697 = vpop.f32.mrb[0].mxu0
        %698 = vmatprep.mubr.f32.mxu0 0.0
        %699 = vmatmul.mubr.f32.gmra.mrb[0].mxu0 %v565
        %v700 = vpop.f32.mrb[0].mxu0
        %v701 = vadd.f32 %v508, %v700
        %v702 = vpop.f32.mrb[0].mxu0
        %703 = vmatprep.mubr.f32.mxu0 0.0
        %704 = vmatmul.mubr.f32.gmra.mrb[0].mxu0 %v568
        %v705 = vpop.f32.mrb[0].mxu0
        %v706 = vadd.f32 %v513, %v705
        %v707 = vpop.f32.mrb[0].mxu0
        %708 = vmatprep.mubr.f32.mxu0 0.0
        %709 = vmatmul.mubr.f32.gmra.mrb[0].mxu0 %v571
        %v710 = vpop.f32.mrb[0].mxu0
        %v711 = vadd.f32 %v518, %v710
        %v712 = vpop.f32.mrb[0].mxu0
        %713 = vmatprep.mubr.f32.mxu0 0.0
        %714 = vmatmul.mubr.f32.gmra.mrb[0].mxu0 %v574
        %v715 = vpop.f32.mrb[0].mxu0
        %v716 = vadd.f32 %v523, %v715
        %v717 = vpop.f32.mrb[0].mxu0
        %718 = vmatprep.mubr.f32.mxu0 0.0
        %719 = vmatmul.mubr.f32.gmra.mrb[0].mxu0 %v577
        %v720 = vpop.f32.mrb[0].mxu0
        %v721 = vadd.f32 %v528, %v720
        %v722 = vpop.f32.mrb[0].mxu0
        %723 = vdwg.mxu0
        %v724 = vld [vmem:[%s4] sm:$0x1]
        %v726 = vlaneseq
        %v727 = vshrl.u32 %v726, 7
        %v728 = vsub.s32 0, %v727
        %v729 = vrot.slane %v724, %v728
        %v731 = vadd.f32 %v646, %v729
        %v732 = vadd.f32 %v651, %v729
        %v733 = vadd.f32 %v656, %v729
        %v734 = vadd.f32 %v661, %v729
        %v735 = vadd.f32 %v666, %v729
        %v736 = vadd.f32 %v671, %v729
        %v737 = vadd.f32 %v676, %v729
        %v738 = vadd.f32 %v681, %v729
        %v739 = vadd.f32 %v686, %v729
        %v740 = vadd.f32 %v691, %v729
        %v741 = vadd.f32 %v696, %v729
        %v742 = vadd.f32 %v701, %v729
        %v743 = vadd.f32 %v706, %v729
        %v744 = vadd.f32 %v711, %v729
        %v745 = vadd.f32 %v716, %v729
        %v746 = vadd.f32 %v721, %v729
        %v747 = vmax.f32 %v731, 0.0
        %v748 = vmax.f32 %v732, 0.0
        %v749 = vmax.f32 %v733, 0.0
        %v750 = vmax.f32 %v734, 0.0
        %v751 = vmax.f32 %v735, 0.0
        %v752 = vmax.f32 %v736, 0.0
        %v753 = vmax.f32 %v737, 0.0
        %v754 = vmax.f32 %v738, 0.0
        %v755 = vmax.f32 %v739, 0.0
        %v756 = vmax.f32 %v740, 0.0
        %v757 = vmax.f32 %v741, 0.0
        %v758 = vmax.f32 %v742, 0.0
        %v759 = vmax.f32 %v743, 0.0
        %v760 = vmax.f32 %v744, 0.0
        %v761 = vmax.f32 %v745, 0.0
        %v762 = vmax.f32 %v746, 0.0
        %v763 = vld [vmem:[%s5] sm:$0x1]
        %v765 = vlaneseq
        %v766 = vshrl.u32 %v765, 7
        %v767 = vsub.s32 0, %v766
        %v768 = vrot.slane %v763, %v767
        %v770 = vmul.f32 %v747, %v768
        %v771 = vmul.f32 %v748, %v768
        %v772 = vmul.f32 %v749, %v768
        %v773 = vmul.f32 %v750, %v768
        %v774 = vmul.f32 %v751, %v768
        %v775 = vmul.f32 %v752, %v768
        %v776 = vmul.f32 %v753, %v768
        %v777 = vmul.f32 %v754, %v768
        %v778 = vmul.f32 %v755, %v768
        %v779 = vmul.f32 %v756, %v768
        %v780 = vmul.f32 %v757, %v768
        %v781 = vmul.f32 %v758, %v768
        %v782 = vmul.f32 %v759, %v768
        %v783 = vmul.f32 %v760, %v768
        %v784 = vmul.f32 %v761, %v768
        %v785 = vmul.f32 %v762, %v768
        %vm786 = vcmask 261120
        %v787 = vsel %vm786, %v770, 0.0
        %788 = vadd.xlane.f32.xlu0 %v787
        %v789 = vpop.xlane.xlu0 %788
        %v790 = vsel %vm786, %v771, 0.0
        %791 = vadd.xlane.f32.xlu0 %v790
        %v792 = vpop.xlane.xlu0 %791
        %v793 = vsel %vm786, %v772, 0.0
        %794 = vadd.xlane.f32.xlu0 %v793
        %v795 = vpop.xlane.xlu0 %794
        %v796 = vsel %vm786, %v773, 0.0
        %797 = vadd.xlane.f32.xlu0 %v796
        %v798 = vpop.xlane.xlu0 %797
        %v799 = vsel %vm786, %v774, 0.0
        %800 = vadd.xlane.f32.xlu0 %v799
        %v801 = vpop.xlane.xlu0 %800
        %v802 = vsel %vm786, %v775, 0.0
        %803 = vadd.xlane.f32.xlu0 %v802
        %v804 = vpop.xlane.xlu0 %803
        %v805 = vsel %vm786, %v776, 0.0
        %806 = vadd.xlane.f32.xlu0 %v805
        %v807 = vpop.xlane.xlu0 %806
        %v808 = vsel %vm786, %v777, 0.0
        %809 = vadd.xlane.f32.xlu0 %v808
        %v810 = vpop.xlane.xlu0 %809
        %v811 = vsel %vm786, %v778, 0.0
        %812 = vadd.xlane.f32.xlu0 %v811
        %v813 = vpop.xlane.xlu0 %812
        %v814 = vsel %vm786, %v779, 0.0
        %815 = vadd.xlane.f32.xlu0 %v814
        %v816 = vpop.xlane.xlu0 %815
        %v817 = vsel %vm786, %v780, 0.0
        %818 = vadd.xlane.f32.xlu0 %v817
        %v819 = vpop.xlane.xlu0 %818
        %v820 = vsel %vm786, %v781, 0.0
        %821 = vadd.xlane.f32.xlu0 %v820
        %v822 = vpop.xlane.xlu0 %821
        %v823 = vsel %vm786, %v782, 0.0
        %824 = vadd.xlane.f32.xlu0 %v823
        %v825 = vpop.xlane.xlu0 %824
        %v826 = vsel %vm786, %v783, 0.0
        %827 = vadd.xlane.f32.xlu0 %v826
        %v828 = vpop.xlane.xlu0 %827
        %v829 = vsel %vm786, %v784, 0.0
        %830 = vadd.xlane.f32.xlu0 %v829
        %v831 = vpop.xlane.xlu0 %830
        %v832 = vsel %vm786, %v785, 0.0
        %833 = vadd.xlane.f32.xlu0 %v832
        %v834 = vpop.xlane.xlu0 %833
        %835 = vxpose.xlu0.b32.start [1/16] %v789, 128
        %836 = vxpose.xlu0.b32.cont [2/16] %v792, 128
        %837 = vxpose.xlu0.b32.cont [3/16] %v795, 128
        %838 = vxpose.xlu0.b32.cont [4/16] %v798, 128
        %839 = vxpose.xlu0.b32.cont [5/16] %v801, 128
        %840 = vxpose.xlu0.b32.cont [6/16] %v804, 128
        %841 = vxpose.xlu0.b32.cont [7/16] %v807, 128
        %842 = vxpose.xlu0.b32.cont [8/16] %v810, 128
        %843 = vxpose.xlu0.b32.cont [9/16] %v813, 128
        %844 = vxpose.xlu0.b32.cont [10/16] %v816, 128
        %845 = vxpose.xlu0.b32.cont [11/16] %v819, 128
        %846 = vxpose.xlu0.b32.cont [12/16] %v822, 128
        %847 = vxpose.xlu0.b32.cont [13/16] %v825, 128
        %848 = vxpose.xlu0.b32.cont [14/16] %v828, 128
        %849 = vxpose.xlu0.b32.cont [15/16] %v831, 128
        %850 = vxpose.xlu0.b32.end [16/16] %v834, 128
        %v851 = vpop.trf.xlu0
        %v852 = vpop.trf.xlu0
        %v853 = vpop.trf.xlu0
        %v854 = vpop.trf.xlu0
        %v855 = vpop.trf.xlu0
        %v856 = vpop.trf.xlu0
        %v857 = vpop.trf.xlu0
        %v858 = vpop.trf.xlu0
        %v859 = vpop.trf.xlu0
        %v860 = vpop.trf.xlu0
        %v861 = vpop.trf.xlu0
        %v862 = vpop.trf.xlu0
        %v863 = vpop.trf.xlu0
        %v864 = vpop.trf.xlu0
        %v865 = vpop.trf.xlu0
        %v866 = vpop.trf.xlu0
        %s867 = sld [smem:[#allocation2]]
        %v868 = vstv %s867
        %v869 = vadd.f32 %v851, %v868
        %870 = vst [vmem:[%s288] sm:$0x1] %v869
        %s871 = sand.u32 %s187, 1
        %s872 = scalar_lea.sflag [#allocation4], %s871
        %s873 = sand.u32 %s187, 1
        %s874 = scalar_lea.vmem [#allocation3], %s873
        // Predicated region
        $region49: #{link_predictor_forward.1} parent=47 // pred_check
          %p875 = pneg %p197
        $region50: #{link_predictor_forward.1} parent=47 // pred_check_branch
          %877 = sbr.rel (%p875) target = $region52
        $region51: #{link_predictor_forward.1} parent=47 // pred_region
          %s879 = ssub.s32 16, 16
          %880 = vsyncadd %s872, %s879
          %s881 = smul.addr %s22, 16
          %s882 = scalar_lea.hbm %s7, %s881
          %s884 = sshll.u32 %s874, 4
          %s885 = int_to_ptr.vmem [resolvable:$true] %s884
          %887 = dma.vmem_to_hbm [thread:$0]  %s885, 16, %s882, %s872
        $region52: #{link_predictor_forward.1} parent=47 // pred_fallthru
          _
      $region48: #{link_predictor_forward.1} parent=5 // pred_fallthru
        _
      %p888 = scmp.le.s32.totalorder 2, %s17
      // Predicated region
      $region53: #{link_predictor_forward.1} parent=5 // pred_check
        %p889 = pneg %p888
      $region54: #{link_predictor_forward.1} parent=5 // pred_check_branch
        %891 = sbr.rel (%p889) target = $region56
      $region55: #{link_predictor_forward.1} parent=5 // pred_region
        %s892 = ssub.s32 %s17, 2
        // Predicated region
        $region57: #{link_predictor_forward.1} parent=55 // pred_check
          %p893 = pneg %p203
        $region58: #{link_predictor_forward.1} parent=55 // pred_check_branch
          %895 = sbr.rel (%p893) target = $region60
        $region59: #{link_predictor_forward.1} parent=55 // pred_region
          %s896 = sand.u32 %s188, 1
          %s897 = scalar_lea.sflag [#allocation4], %s896
          %s898 = sand.u32 %s188, 1
          %s899 = scalar_lea.vmem [#allocation3], %s898
          %900 = dma.done %s897, 16
        $region60: #{link_predictor_forward.1} parent=55 // pred_fallthru
          _
      $region56: #{link_predictor_forward.1} parent=5 // pred_fallthru
        _
    $region6: #{link_predictor_forward.1} parent=1 // loop_footer
      %s21 = sadd.s32 1, %s17
    $region7: #{link_predictor_forward.1} parent=1 // loop_footer_branch
      %16 = sbr.rel target = $region3
    $region8: #{link_predictor_forward.1} parent=1 // loop_exit
      _
    %901 = vsyncpa [#allocation4], 1
    %s902 = scalar_lea.sflag [#allocation4], 1
    %903 = vsyncpa %s902, 1

</llo_original>
